<compile_context>
chip_gen: v6e
topology: v6e:2x2x1
jax: 0.10.0
libtpu: 0.0.40
codegen_flags: <defaults>
</compile_context>

<pallas_src>
import jax
import jax.numpy as jnp
from jax.experimental import pallas as pl
from jax.experimental.pallas import tpu as pltpu


def _round_up(x, m):
    return (x + m - 1) // m * m


def attention_gru_cell_kernel(fact_ref, hidden_ref, gate_ref, w_ref, u_ref, b_ref, h_ref):
    # fact_ref:   (tm, I)   activation tile (native dtype)
    # hidden_ref: (tm, Hp)  activation tile (native dtype, lane-padded hidden)
    # gate_ref:   (tm, 1)   f32
    # w_ref:      (I,  Hp)  W^T  -- resident across the batch grid
    # u_ref:      (Hp, Hp)  U^T  -- resident across the batch grid
    # b_ref:      (1,  Hp)  W_b + U_b, f32 -- resident
    h_hat = jnp.tanh(
        jnp.dot(fact_ref[...], w_ref[...], preferred_element_type=jnp.float32)
        + jnp.dot(hidden_ref[...], u_ref[...], preferred_element_type=jnp.float32)
        + b_ref[...]
    )
    hidden = hidden_ref[...].astype(jnp.float32)
    g = gate_ref[...]                                  # (tm, 1) broadcasts over lanes
    h_ref[...] = (hidden + g * (h_hat - hidden)).astype(h_ref.dtype)


def prepare_params(params, dtype=jnp.bfloat16):
    """One-time weight prep: transpose + lane-pad + fuse biases. Dead Wr/Ur dropped."""
    W = jnp.asarray(params["W_w"])          # (H, I)
    U = jnp.asarray(params["U_w"])          # (H, H)
    H, I = W.shape
    Hp = _round_up(H, 128)                  # lane-dense hidden dim (multiple of 128)
    W_t = jnp.zeros((I, Hp), dtype).at[:, :H].set(W.T.astype(dtype))
    U_t = jnp.zeros((Hp, Hp), dtype).at[:H, :H].set(U.T.astype(dtype))
    bias = jnp.zeros((1, Hp), jnp.float32).at[:, :H].set(
        (params["W_b"] + params["U_b"]).astype(jnp.float32).reshape(1, H))
    return {"W_t": W_t, "U_t": U_t, "bias": bias, "I": I, "H": H, "H_pad": Hp}


def _pick_batch_tile(B):
    """Large sublane-aligned batch tile; aim for >=2 grid steps (v7x has 2 TCs)."""
    if B <= 8:
        return B                            # single block; block dim == array dim is legal
    half = -(-B // 2)                       # cdiv(B, 2)
    return min(512, _round_up(half, 8))


def attention_gru_cell(fact, hidden, gate, prepped, *, donate_hidden=False):
    """fact (B, I), hidden (B, H), gate (B,) -> h (B, H) in hidden.dtype."""
    B, I = fact.shape
    H, Hp = prepped["H"], prepped["H_pad"]
    assert hidden.shape == (B, H) and I == prepped["I"]
    out_dtype = hidden.dtype

    gate2d = gate.reshape(B, 1).astype(jnp.float32)
    hidden_in = hidden if Hp == H else jnp.pad(hidden, ((0, 0), (0, Hp - H)))

    tm = _pick_batch_tile(B)
    grid = (pl.cdiv(B, tm),)

    # VMEM budget: double-buffered activation tiles + (default 2x-buffered) resident weights.
    act_bytes = max(fact.dtype.itemsize, hidden_in.dtype.itemsize)
    w_bytes = prepped["W_t"].dtype.itemsize
    out_bytes = jnp.dtype(out_dtype).itemsize
    budget = (2 * tm * (I * act_bytes + Hp * act_bytes + 4 + Hp * out_bytes)
              + 2 * ((I * Hp + Hp * Hp) * w_bytes + Hp * 4)
              + (4 << 20))                  # headroom / internal scratch
    vmem_limit = int(min(max(budget, 32 << 20), 128 << 20))

    h_pad = pl.pallas_call(
        attention_gru_cell_kernel,
        out_shape=jax.ShapeDtypeStruct((B, Hp), out_dtype),
        grid_spec=pl.GridSpec(
            grid=grid,
            in_specs=[
                pl.BlockSpec((tm, I), lambda i: (i, 0)),    # fact   (tiled over batch)
                pl.BlockSpec((tm, Hp), lambda i: (i, 0)),   # hidden (tiled over batch)
                pl.BlockSpec((tm, 1), lambda i: (i, 0)),    # gate   (tiled over batch)
                pl.BlockSpec((I, Hp), lambda i: (0, 0)),    # W^T    (resident in VMEM)
                pl.BlockSpec((Hp, Hp), lambda i: (0, 0)),   # U^T    (resident in VMEM)
                pl.BlockSpec((1, Hp), lambda i: (0, 0)),    # fused bias (resident)
            ],
            out_specs=pl.BlockSpec((tm, Hp), lambda i: (i, 0)),
        ),
        compiler_params=pltpu.CompilerParams(
            dimension_semantics=("parallel",),
            vmem_limit_bytes=vmem_limit,
        ),
        input_output_aliases=({1: 0} if donate_hidden else {}),
    )(fact, hidden_in, gate2d, prepped["W_t"], prepped["U_t"], prepped["bias"])

    return h_pad if Hp == H else h_pad[:, :H]


def _xavier_normal(key, out_f, in_f):
    std = (2.0 / (in_f + out_f)) ** 0.5
    return std * jax.random.normal(key, (out_f, in_f), dtype=jnp.float32)


def init_params(key, input_size, hidden_size):
    # Wr/Ur exist in the PyTorch module but are dead in forward(); kept only for
    # parameter parity — they never reach the kernel.
    ks = jax.random.split(key, 8)
    bound_in = 1.0 / (input_size ** 0.5)
    bound_h = 1.0 / (hidden_size ** 0.5)
    return {
        "Wr_w": _xavier_normal(ks[0], hidden_size, input_size),
        "Wr_b": jax.random.uniform(ks[1], (hidden_size,), jnp.float32, -bound_in, bound_in),
        "W_w": _xavier_normal(ks[2], hidden_size, input_size),
        "W_b": jax.random.uniform(ks[3], (hidden_size,), jnp.float32, -bound_in, bound_in),
        "Ur_w": _xavier_normal(ks[4], hidden_size, hidden_size),
        "Ur_b": jax.random.uniform(ks[5], (hidden_size,), jnp.float32, -bound_h, bound_h),
        "U_w": _xavier_normal(ks[6], hidden_size, hidden_size),
        "U_b": jax.random.uniform(ks[7], (hidden_size,), jnp.float32, -bound_h, bound_h),
    }


def reference(fact, hidden, gate, p):
    h_hat = jnp.tanh(fact @ p["W_w"].T + p["W_b"] + hidden @ p["U_w"].T + p["U_b"])
    g = gate[:, None]
    return g * h_hat + (1.0 - g) * hidden


if __name__ == "__main__":
    B, INPUT_SIZE, HIDDEN_SIZE = 8, 16, 32
    key = jax.random.PRNGKey(0)
    k_fact, k_hid, k_gate, k_par = jax.random.split(key, 4)

    fact = jax.random.normal(k_fact, (B, INPUT_SIZE), dtype=jnp.float32)
    hidden = jax.random.normal(k_hid, (B, HIDDEN_SIZE), dtype=jnp.float32)
    gate = jax.random.uniform(k_gate, (B,), dtype=jnp.float32)   # attention gate in [0,1]
    params = init_params(k_par, INPUT_SIZE, HIDDEN_SIZE)
    h_ref = reference(fact, hidden, gate, params)

    # f32 path: tight correctness check against the reference.
    prepped32 = prepare_params(params, dtype=jnp.float32)
    h32 = jax.block_until_ready(attention_gru_cell(fact, hidden, gate, prepped32))
    assert h32.shape == (B, HIDDEN_SIZE) and h32.dtype == jnp.float32
    assert jnp.allclose(h32, h_ref, atol=1e-5, rtol=1e-5), "f32 mismatch vs reference"

    # bf16 path: half the HBM bytes per block; f32 accumulation/tanh inside the kernel.
    prepped16 = prepare_params(params, dtype=jnp.bfloat16)
    h16 = jax.block_until_ready(
        attention_gru_cell(fact.astype(jnp.bfloat16), hidden.astype(jnp.bfloat16),
                           gate, prepped16))
    assert h16.shape == (B, HIDDEN_SIZE) and h16.dtype == jnp.bfloat16
    assert jnp.allclose(h16.astype(jnp.float32), h_ref, atol=5e-2, rtol=5e-2), \
        "bf16 mismatch vs reference"

    print("KERNEL_OK")
</pallas_src>

<mosaic_0001>
module attributes {stable_mosaic.version = 11 : i64} {
  func.func @attention_gru_cell_kernel(%arg0: i32, %arg1: memref<8x16xf32, #tpu.memory_space<vmem>>, %arg2: memref<8x128xf32, #tpu.memory_space<vmem>>, %arg3: memref<8x1xf32, #tpu.memory_space<vmem>>, %arg4: memref<16x128xf32, #tpu.memory_space<vmem>>, %arg5: memref<128x128xf32, #tpu.memory_space<vmem>>, %arg6: memref<1x128xf32, #tpu.memory_space<vmem>>, %arg7: memref<8x128xf32, #tpu.memory_space<vmem>>) attributes {dimension_semantics = [#tpu.dimension_semantics<parallel>], iteration_bounds = array<i64: 1>, scalar_prefetch = 0 : i64, scratch_operands = 0 : i64, tpu.core_type = #tpu.core_type<tc>, window_params = [{transform_indices = @transform_0, window_bounds = array<i64: 8, 16>}, {transform_indices = @transform_1, window_bounds = array<i64: 8, 128>}, {transform_indices = @transform_2, window_bounds = array<i64: 8, 1>}, {pipeline_mode = #tpu.pipeline_mode<synchronous>, transform_indices = @transform_3, window_bounds = array<i64: 16, 128>}, {pipeline_mode = #tpu.pipeline_mode<synchronous>, transform_indices = @transform_4, window_bounds = array<i64: 128, 128>}, {pipeline_mode = #tpu.pipeline_mode<synchronous>, transform_indices = @transform_5, window_bounds = array<i64: 1, 128>}, {transform_indices = @transform_6, window_bounds = array<i64: 8, 128>}]} {
    %c0 = arith.constant 0 : index
    %c0_0 = arith.constant 0 : index
    %0 = vector.load %arg1[%c0, %c0_0] : memref<8x16xf32, #tpu.memory_space<vmem>>, vector<8x16xf32>
    %c0_1 = arith.constant 0 : index
    %c0_2 = arith.constant 0 : index
    %1 = vector.load %arg4[%c0_1, %c0_2] : memref<16x128xf32, #tpu.memory_space<vmem>>, vector<16x128xf32>
    %cst = arith.constant dense<0.000000e+00> : vector<8x128xf32>
    %2 = tpu.matmul %0, %1, %cst {dimension_numbers = #tpu.dot_dimension_numbers<[1], [0], [0], [1], [0, 0, 1, 1], [], []>} : vector<8x16xf32>, vector<16x128xf32>, vector<8x128xf32> -> vector<8x128xf32>
    %c0_3 = arith.constant 0 : index
    %c0_4 = arith.constant 0 : index
    %3 = vector.load %arg2[%c0_3, %c0_4] : memref<8x128xf32, #tpu.memory_space<vmem>>, vector<8x128xf32>
    %c0_5 = arith.constant 0 : index
    %c0_6 = arith.constant 0 : index
    %4 = vector.load %arg5[%c0_5, %c0_6] : memref<128x128xf32, #tpu.memory_space<vmem>>, vector<128x128xf32>
    %cst_7 = arith.constant dense<0.000000e+00> : vector<8x128xf32>
    %5 = tpu.matmul %3, %4, %cst_7 {dimension_numbers = #tpu.dot_dimension_numbers<[1], [0], [0], [1], [0, 0, 1, 1], [], []>} : vector<8x128xf32>, vector<128x128xf32>, vector<8x128xf32> -> vector<8x128xf32>
    %6 = arith.addf %2, %5 : vector<8x128xf32>
    %c0_8 = arith.constant 0 : index
    %c0_9 = arith.constant 0 : index
    %7 = vector.load %arg6[%c0_8, %c0_9] : memref<1x128xf32, #tpu.memory_space<vmem>>, vector<1x128xf32>
    %8 = vector.broadcast %7 : vector<1x128xf32> to vector<8x128xf32>
    %9 = arith.addf %6, %8 : vector<8x128xf32>
    %10 = math.tanh %9 : vector<8x128xf32>
    %c0_10 = arith.constant 0 : index
    %c0_11 = arith.constant 0 : index
    %11 = vector.load %arg2[%c0_10, %c0_11] : memref<8x128xf32, #tpu.memory_space<vmem>>, vector<8x128xf32>
    %c0_12 = arith.constant 0 : index
    %c0_13 = arith.constant 0 : index
    %12 = vector.load %arg3[%c0_12, %c0_13] : memref<8x1xf32, #tpu.memory_space<vmem>>, vector<8x1xf32>
    %13 = arith.subf %10, %11 : vector<8x128xf32>
    %14 = vector.broadcast %12 : vector<8x1xf32> to vector<8x128xf32>
    %15 = arith.mulf %14, %13 : vector<8x128xf32>
    %16 = arith.addf %11, %15 : vector<8x128xf32>
    %c0_14 = arith.constant 0 : index
    %c0_15 = arith.constant 0 : index
    %17 = vector.load %arg7[%c0_14, %c0_15] : memref<8x128xf32, #tpu.memory_space<vmem>>, vector<8x128xf32>
    tpu.vector_store %arg7[%c0_14, %c0_15], %16 {strides = array<i32>} : memref<8x128xf32, #tpu.memory_space<vmem>>, vector<8x128xf32>,
    return
  }
  func.func @transform_0(%arg0: i32) -> (i32, i32) {
    %c0_i32 = arith.constant 0 : i32
    %c0_i32_0 = arith.constant 0 : i32
    return %arg0, %c0_i32 : i32, i32
  }
  func.func @transform_1(%arg0: i32) -> (i32, i32) {
    %c0_i32 = arith.constant 0 : i32
    %c0_i32_0 = arith.constant 0 : i32
    return %arg0, %c0_i32 : i32, i32
  }
  func.func @transform_2(%arg0: i32) -> (i32, i32) {
    %c0_i32 = arith.constant 0 : i32
    %c0_i32_0 = arith.constant 0 : i32
    return %arg0, %c0_i32 : i32, i32
  }
  func.func @transform_3(%arg0: i32) -> (i32, i32) {
    %c0_i32 = arith.constant 0 : i32
    %c0_i32_0 = arith.constant 0 : i32
    %c0_i32_1 = arith.constant 0 : i32
    return %c0_i32, %c0_i32_0 : i32, i32
  }
  func.func @transform_4(%arg0: i32) -> (i32, i32) {
    %c0_i32 = arith.constant 0 : i32
    %c0_i32_0 = arith.constant 0 : i32
    %c0_i32_1 = arith.constant 0 : i32
    return %c0_i32, %c0_i32_0 : i32, i32
  }
  func.func @transform_5(%arg0: i32) -> (i32, i32) {
    %c0_i32 = arith.constant 0 : i32
    %c0_i32_0 = arith.constant 0 : i32
    %c0_i32_1 = arith.constant 0 : i32
    return %c0_i32, %c0_i32_0 : i32, i32
  }
  func.func @transform_6(%arg0: i32) -> (i32, i32) {
    %c0_i32 = arith.constant 0 : i32
    %c0_i32_0 = arith.constant 0 : i32
    return %arg0, %c0_i32 : i32, i32
  }
}

</mosaic_0001>

<llo_original>
// kernel: tpu_custom_call.1
$region0: #{tpu_custom_call.1}
  #allocation0 [shape = 'u32[]', space=smem, size = 0x4, offset = 0x4, fixed_abs, tag = 'smem constant byte address 0x4 - core index']
  #allocation1 [shape = 'u32[144,128]{1,0:T(1,128)}', space=vmem, size = 0x12000, scoped, tag = 'internal scratch']
  %s0 = inlined_call_operand.vmem [shape: f32[8,16], index: 0, kind: input, shape index: {}]
  %s1 = inlined_call_operand.hbm [shape: f32[8,128], index: 1, kind: input, shape index: {}]
  %s2 = inlined_call_operand.vmem [shape: f32[8,1], index: 2, kind: input, shape index: {}]
  %s3 = inlined_call_operand.hbm [shape: f32[16,128], index: 3, kind: input, shape index: {}]
  %s4 = inlined_call_operand.hbm [shape: f32[128,128], index: 4, kind: input, shape index: {}]
  %s5 = inlined_call_operand.vmem [shape: f32[1,128], index: 5, kind: input, shape index: {}]
  %s6 = inlined_call_operand.hbm [shape: f32[8,128], index: 6, kind: output, shape index: {}]
  %s7 = sld [smem:[#allocation0]]
  $region46: #{tpu_custom_call.1} parent=0
    _
  %s9 = ssub.s32 1, %s7
  %s10 = scalar_select 0, %s9, %s7
  $region1: #{tpu_custom_call.1} parent=0
    #allocation2 [shape = 'u8[4096]{0}', space=vmem, size = 0x1000, scoped, tag = 'input window, operand 1, single buffered']
    #allocation3 [shape = 's32[1]{0}', space=sflag, size = 0x4, scoped, tag = 'scoped memory for tpu_custom_call.1']
    #allocation4 [shape = 's32[1]{0}', space=sflag, size = 0x4, scoped, tag = 'scoped memory for tpu_custom_call.1']
    #allocation5 [shape = 'u8[8192]{0}', space=vmem, size = 0x2000, scoped, tag = 'input window, operand 3, single buffered']
    #allocation6 [shape = 's32[1]{0}', space=sflag, size = 0x4, scoped, tag = 'scoped memory for tpu_custom_call.1']
    #allocation7 [shape = 'u8[65536]{0}', space=vmem, size = 0x10000, scoped, tag = 'input window, operand 4, single buffered']
    #allocation8 [shape = 'u8[4096]{0}', space=vmem, size = 0x1000, scoped, tag = 'output window, operand 0, single buffered']
    %11 = vsyncpa [#allocation3], 0
    %12 = vsyncpa [#allocation6], 0
    %13 = vsyncpa [#allocation4], 0
    // Predicated region
    $region2: #{tpu_custom_call.1} parent=1 // pred_check
      _
    $region3: #{tpu_custom_call.1} parent=1 // pred_check_branch
      %15 = sbr.rel (0) target = $region5
    $region4: #{tpu_custom_call.1} parent=1 // pred_region
      _
    $region5: #{tpu_custom_call.1} parent=1 // pred_fallthru
      _
    // Predicated region
    $region6: #{tpu_custom_call.1} parent=1 // pred_check
      _
    $region7: #{tpu_custom_call.1} parent=1 // pred_check_branch
      %17 = sbr.rel (0) target = $region9
    $region8: #{tpu_custom_call.1} parent=1 // pred_region
      %s19 = ssub.s32 128, 128
      %20 = vsyncadd [#allocation3], %s19
      %s22 = sshll.u32 [#allocation2], 4
      %s23 = int_to_ptr.vmem [resolvable:$true] %s22
      %25 = dma.hbm_to_vmem [thread:$0]  %s1, 128, %s23, [#allocation3]
    $region9: #{tpu_custom_call.1} parent=1 // pred_fallthru
      _
    // Predicated region
    $region10: #{tpu_custom_call.1} parent=1 // pred_check
      _
    $region11: #{tpu_custom_call.1} parent=1 // pred_check_branch
      %27 = sbr.rel (0) target = $region13
    $region12: #{tpu_custom_call.1} parent=1 // pred_region
      _
    $region13: #{tpu_custom_call.1} parent=1 // pred_fallthru
      _
    // Predicated region
    $region14: #{tpu_custom_call.1} parent=1 // pred_check
      _
    $region15: #{tpu_custom_call.1} parent=1 // pred_check_branch
      %29 = sbr.rel (0) target = $region17
    $region16: #{tpu_custom_call.1} parent=1 // pred_region
      %s31 = ssub.s32 256, 256
      %32 = vsyncadd [#allocation6], %s31
      %s33 = sshll.u32 [#allocation5], 4
      %s34 = int_to_ptr.vmem [resolvable:$true] %s33
      %39 = dma.hbm_to_vmem [thread:$0]  %s3, 256, %s34, [#allocation6], 128, 128, 8
    $region17: #{tpu_custom_call.1} parent=1 // pred_fallthru
      _
    // Predicated region
    $region18: #{tpu_custom_call.1} parent=1 // pred_check
      _
    $region19: #{tpu_custom_call.1} parent=1 // pred_check_branch
      %41 = sbr.rel (0) target = $region21
    $region20: #{tpu_custom_call.1} parent=1 // pred_region
      %s43 = ssub.s32 2048, 2048
      %44 = vsyncadd [#allocation6], %s43
      %s45 = sshll.u32 [#allocation7], 4
      %s46 = int_to_ptr.vmem [resolvable:$true] %s45
      %51 = dma.hbm_to_vmem [thread:$0]  %s4, 2048, %s46, [#allocation6], 128, 128, 8
    $region21: #{tpu_custom_call.1} parent=1 // pred_fallthru
      _
    // Predicated region
    $region22: #{tpu_custom_call.1} parent=1 // pred_check
      _
    $region23: #{tpu_custom_call.1} parent=1 // pred_check_branch
      %53 = sbr.rel (0) target = $region25
    $region24: #{tpu_custom_call.1} parent=1 // pred_region
      _
    $region25: #{tpu_custom_call.1} parent=1 // pred_fallthru
      _
    // Predicated region
    $region26: #{tpu_custom_call.1} parent=1 // pred_check
      _
    $region27: #{tpu_custom_call.1} parent=1 // pred_check_branch
      %55 = sbr.rel (0) target = $region29
    $region28: #{tpu_custom_call.1} parent=1 // pred_region
      %56 = dma.done [#allocation3], 128
    $region29: #{tpu_custom_call.1} parent=1 // pred_fallthru
      _
    // Predicated region
    $region30: #{tpu_custom_call.1} parent=1 // pred_check
      _
    $region31: #{tpu_custom_call.1} parent=1 // pred_check_branch
      %58 = sbr.rel (0) target = $region33
    $region32: #{tpu_custom_call.1} parent=1 // pred_region
      %59 = dma.done [#allocation6], 256
    $region33: #{tpu_custom_call.1} parent=1 // pred_fallthru
      _
    // Predicated region
    $region34: #{tpu_custom_call.1} parent=1 // pred_check
      _
    $region35: #{tpu_custom_call.1} parent=1 // pred_check_branch
      %61 = sbr.rel (0) target = $region37
    $region36: #{tpu_custom_call.1} parent=1 // pred_region
      %62 = dma.done [#allocation6], 2048
    $region37: #{tpu_custom_call.1} parent=1 // pred_fallthru
      _
    %v63 = vld [vmem:[%s0] sm:$0xff]
    %v64 = vld [vmem:[#allocation5] sm:$0xff]
    %v65 = vld [vmem:[#allocation5 + $0x8] sm:$0xff]
    %v66 = vld [vmem:[#allocation2] sm:$0xff]
    %v67 = vld [vmem:[#allocation7] sm:$0xff]
    %v68 = vld [vmem:[#allocation7 + $0x8] sm:$0xff]
    %v69 = vld [vmem:[#allocation7 + $0x10] sm:$0xff]
    %v70 = vld [vmem:[#allocation7 + $0x18] sm:$0xff]
    %v71 = vld [vmem:[#allocation7 + $0x20] sm:$0xff]
    %v72 = vld [vmem:[#allocation7 + $0x28] sm:$0xff]
    %v73 = vld [vmem:[#allocation7 + $0x30] sm:$0xff]
    %v74 = vld [vmem:[#allocation7 + $0x38] sm:$0xff]
    %v75 = vld [vmem:[#allocation7 + $0x40] sm:$0xff]
    %v76 = vld [vmem:[#allocation7 + $0x48] sm:$0xff]
    %v77 = vld [vmem:[#allocation7 + $0x50] sm:$0xff]
    %v78 = vld [vmem:[#allocation7 + $0x58] sm:$0xff]
    %v79 = vld [vmem:[#allocation7 + $0x60] sm:$0xff]
    %v80 = vld [vmem:[#allocation7 + $0x68] sm:$0xff]
    %v81 = vld [vmem:[#allocation7 + $0x70] sm:$0xff]
    %v82 = vld [vmem:[#allocation7 + $0x78] sm:$0xff]
    %83 = vmatprep.subr.mxu0 0.0
    %84 = vmatpush1.msra.mxu0 %v82
    %85 = vmatprep.subr.mxu0 0.0
    %86 = vmatpush1.msra.mxu0 %v81
    %87 = vmatprep.subr.mxu0 0.0
    %88 = vmatpush1.msra.mxu0 %v80
    %89 = vmatprep.subr.mxu0 0.0
    %90 = vmatpush1.msra.mxu0 %v79
    %91 = vmatprep.subr.mxu0 0.0
    %92 = vmatpush1.msra.mxu0 %v78
    %93 = vmatprep.subr.mxu0 0.0
    %94 = vmatpush1.msra.mxu0 %v77
    %95 = vmatprep.subr.mxu0 0.0
    %96 = vmatpush1.msra.mxu0 %v76
    %97 = vmatprep.subr.mxu0 0.0
    %98 = vmatpush1.msra.mxu0 %v75
    %99 = vmatprep.subr.mxu0 0.0
    %100 = vmatpush1.msra.mxu0 %v74
    %101 = vmatprep.subr.mxu0 0.0
    %102 = vmatpush1.msra.mxu0 %v73
    %103 = vmatprep.subr.mxu0 0.0
    %104 = vmatpush1.msra.mxu0 %v72
    %105 = vmatprep.subr.mxu0 0.0
    %106 = vmatpush1.msra.mxu0 %v71
    %107 = vmatprep.subr.mxu0 0.0
    %108 = vmatpush1.msra.mxu0 %v70
    %109 = vmatprep.subr.mxu0 0.0
    %110 = vmatpush1.msra.mxu0 %v69
    %111 = vmatprep.subr.mxu0 0.0
    %112 = vmatpush1.msra.mxu0 %v68
    %113 = vmatprep.subr.mxu0 0.0
    %114 = vmatpush1.msra.mxu0 %v67
    %115 = vmatprep.subr.mxu0 0.0
    %116 = vmatpush2.msra.mxu0 0.0
    %117 = vmatprep.subr.mxu0 0.0
    %118 = vmatpush2.msra.mxu0 0.0
    %119 = vmatprep.subr.mxu0 0.0
    %120 = vmatpush2.msra.mxu0 0.0
    %121 = vmatprep.subr.mxu0 0.0
    %122 = vmatpush2.msra.mxu0 0.0
    %123 = vmatprep.subr.mxu0 0.0
    %124 = vmatpush2.msra.mxu0 0.0
    %125 = vmatprep.subr.mxu0 0.0
    %126 = vmatpush2.msra.mxu0 0.0
    %127 = vmatprep.subr.mxu0 0.0
    %128 = vmatpush2.msra.mxu0 0.0
    %129 = vmatprep.subr.mxu0 0.0
    %130 = vmatpush2.msra.mxu0 0.0
    %131 = vmatprep.subr.mxu0 0.0
    %132 = vmatpush2.msra.mxu0 0.0
    %133 = vmatprep.subr.mxu0 0.0
    %134 = vmatpush2.msra.mxu0 0.0
    %135 = vmatprep.subr.mxu0 0.0
    %136 = vmatpush2.msra.mxu0 0.0
    %137 = vmatprep.subr.mxu0 0.0
    %138 = vmatpush2.msra.mxu0 0.0
    %139 = vmatprep.subr.mxu0 0.0
    %140 = vmatpush2.msra.mxu0 0.0
    %141 = vmatprep.subr.mxu0 0.0
    %142 = vmatpush2.msra.mxu0 0.0
    %143 = vmatprep.subr.mxu0 0.0
    %144 = vmatpush2.msra.mxu0 0.0
    %145 = vmatprep.subr.mxu0 0.0
    %146 = vmatpush2.msra.mxu0 0.0
    %147 = vmatprep.mubr.f32.mxu0 0.0
    %148 = vmatmul.mubr.f32.gmra.mxu0 %v66
    %v149 = vpop.f32.mrf.mxu0
    %v150 = vadd.f32 0.0, %v149
    %v151 = vpop.f32.mrf.mxu0
    %152 = vdwg.mxu0
    %vm153 = vcmask 130048
    %v155 = vsel %vm153, %v63, 0
    %157 = vmatprep.subr.mxu0 0.0
    %158 = vmatpush1.msra.mxu0 0.0
    %159 = vmatprep.subr.mxu0 0.0
    %160 = vmatpush1.msra.mxu0 0.0
    %161 = vmatprep.subr.mxu0 0.0
    %162 = vmatpush1.msra.mxu0 0.0
    %163 = vmatprep.subr.mxu0 0.0
    %164 = vmatpush1.msra.mxu0 0.0
    %165 = vmatprep.subr.mxu0 0.0
    %166 = vmatpush1.msra.mxu0 0.0
    %167 = vmatprep.subr.mxu0 0.0
    %168 = vmatpush1.msra.mxu0 0.0
    %169 = vmatprep.subr.mxu0 0.0
    %170 = vmatpush1.msra.mxu0 0.0
    %171 = vmatprep.subr.mxu0 0.0
    %172 = vmatpush1.msra.mxu0 0.0
    %173 = vmatprep.subr.mxu0 0.0
    %174 = vmatpush1.msra.mxu0 0.0
    %175 = vmatprep.subr.mxu0 0.0
    %176 = vmatpush1.msra.mxu0 0.0
    %177 = vmatprep.subr.mxu0 0.0
    %178 = vmatpush1.msra.mxu0 0.0
    %179 = vmatprep.subr.mxu0 0.0
    %180 = vmatpush1.msra.mxu0 0.0
    %181 = vmatprep.subr.mxu0 0.0
    %182 = vmatpush1.msra.mxu0 0.0
    %183 = vmatprep.subr.mxu0 0.0
    %184 = vmatpush1.msra.mxu0 0.0
    %185 = vmatprep.subr.mxu0 0.0
    %186 = vmatpush1.msra.mxu0 %v65
    %187 = vmatprep.subr.mxu0 0.0
    %188 = vmatpush1.msra.mxu0 %v64
    %189 = vmatprep.subr.mxu0 0.0
    %190 = vmatpush2.msra.mxu0 0.0
    %191 = vmatprep.subr.mxu0 0.0
    %192 = vmatpush2.msra.mxu0 0.0
    %193 = vmatprep.subr.mxu0 0.0
    %194 = vmatpush2.msra.mxu0 0.0
    %195 = vmatprep.subr.mxu0 0.0
    %196 = vmatpush2.msra.mxu0 0.0
    %197 = vmatprep.subr.mxu0 0.0
    %198 = vmatpush2.msra.mxu0 0.0
    %199 = vmatprep.subr.mxu0 0.0
    %200 = vmatpush2.msra.mxu0 0.0
    %201 = vmatprep.subr.mxu0 0.0
    %202 = vmatpush2.msra.mxu0 0.0
    %203 = vmatprep.subr.mxu0 0.0
    %204 = vmatpush2.msra.mxu0 0.0
    %205 = vmatprep.subr.mxu0 0.0
    %206 = vmatpush2.msra.mxu0 0.0
    %207 = vmatprep.subr.mxu0 0.0
    %208 = vmatpush2.msra.mxu0 0.0
    %209 = vmatprep.subr.mxu0 0.0
    %210 = vmatpush2.msra.mxu0 0.0
    %211 = vmatprep.subr.mxu0 0.0
    %212 = vmatpush2.msra.mxu0 0.0
    %213 = vmatprep.subr.mxu0 0.0
    %214 = vmatpush2.msra.mxu0 0.0
    %215 = vmatprep.subr.mxu0 0.0
    %216 = vmatpush2.msra.mxu0 0.0
    %217 = vmatprep.subr.mxu0 0.0
    %218 = vmatpush2.msra.mxu0 0.0
    %219 = vmatprep.subr.mxu0 0.0
    %220 = vmatpush2.msra.mxu0 0.0
    %221 = vmatprep.mubr.f32.mxu0 0.0
    %222 = vmatmul.mubr.f32.gmra.mxu0 %v155
    %v223 = vpop.f32.mrf.mxu0
    %v224 = vadd.f32 %v150, %v223
    %v225 = vpop.f32.mrf.mxu0
    %226 = vdwg.mxu0
    %v227 = vld [vmem:[%s5] sm:$0x1]
    %v229 = vlaneseq
    %v230 = vshrl.u32 %v229, 7
    %v231 = vsub.s32 0, %v230
    %v232 = vrot.slane %v227, %v231
    %v234 = vadd.f32 %v224, %v232
    %v235 = vtanh.pop %v234
    %v236 = vld [vmem:[%s2] sm:$0xff]
    %v237 = vsub.f32 %v235, %v66
    %239 = vset.pattern.permute.xlu0 0
    %240 = vperm.xlu0 %239, %v236
    %v241 = vpop.permute.xlu0 %240
    %v243 = vmul.f32 %v241, %v237
    %v244 = vadd.f32 %v66, %v243
    %245 = vst [vmem:[#allocation8] sm:$0xff] %v244
    // Predicated region
    $region38: #{tpu_custom_call.1} parent=1 // pred_check
      _
    $region39: #{tpu_custom_call.1} parent=1 // pred_check_branch
      %247 = sbr.rel (0) target = $region41
    $region40: #{tpu_custom_call.1} parent=1 // pred_region
      %s249 = ssub.s32 128, 128
      %250 = vsyncadd [#allocation4], %s249
      %s252 = sshll.u32 [#allocation8], 4
      %s253 = int_to_ptr.vmem [resolvable:$true] %s252
      %255 = dma.vmem_to_hbm [thread:$0]  %s253, 128, %s6, [#allocation4]
    $region41: #{tpu_custom_call.1} parent=1 // pred_fallthru
      _
    // Predicated region
    $region42: #{tpu_custom_call.1} parent=1 // pred_check
      _
    $region43: #{tpu_custom_call.1} parent=1 // pred_check_branch
      %257 = sbr.rel (0) target = $region45
    $region44: #{tpu_custom_call.1} parent=1 // pred_region
      %258 = dma.done [#allocation4], 128
    $region45: #{tpu_custom_call.1} parent=1 // pred_fallthru
      _
    %259 = vsyncpa [#allocation3], 1
    %260 = vsyncpa [#allocation6], 1
    %261 = vsyncpa [#allocation4], 1

</llo_original>
